<compile_context>
chip_gen: v5e
topology: v5e:2x2
jax: 0.10.0
libtpu: 0.0.40
codegen_flags: <defaults>
</compile_context>

<pallas_src>
import jax
import jax.numpy as jnp
from jax.experimental import pallas as pl
from jax.experimental.pallas import tpu as pltpu

BN_EPS = 1e-5


def _latent_states_kernel(x_ref, w_ref, gb_ref, out_ref):
    """x: (B, cin), w: (cin, 2L), gb: (2, 2L) [gamma; beta], out: (1, B, 2L)."""
    x = x_ref[...]
    w = w_ref[...]

    # Fused Linear for both branches (single MXU matmul, f32 accumulation).
    y = jnp.dot(x, w, preferred_element_type=jnp.float32)        # (B, 2L)

    # Training-mode BatchNorm1d statistics over the batch (biased variance),
    # computed in a single pass over y.
    inv_b = 1.0 / y.shape[0]
    s = jnp.sum(y, axis=0, keepdims=True)                         # (1, 2L)
    sq = jnp.sum(y * y, axis=0, keepdims=True)                    # (1, 2L)
    mean = s * inv_b
    var = jnp.maximum(sq * inv_b - mean * mean, 0.0)

    gamma = gb_ref[0:1, :]                                        # (1, 2L)
    beta = gb_ref[1:2, :]                                         # (1, 2L)

    # Fold gamma into the normalization scale and beta/mean into a shift:
    # out = (y - mean) * gamma * rsqrt(var + eps) + beta  ==  y * scale + shift
    scale = gamma * jax.lax.rsqrt(var + BN_EPS)
    shift = beta - mean * scale

    out_ref[0] = jnp.maximum(y * scale + shift, 0.0)


def latent_states_forward(x, params):
    """x: (B, codelayer_dim) float32. Returns (dec_h, dec_c), each (1, B, lstm_dim)."""
    B, _ = x.shape
    lstm_dim = params["wh"].shape[1]

    # Pack the two branches: one weight matrix, one (gamma; beta) table.
    # (The Linear biases bh/bc are intentionally NOT used: under train-mode
    #  BatchNorm the batch-mean subtraction cancels them exactly.)
    w = jnp.concatenate([params["wh"], params["wc"]], axis=1)           # (cin, 2L)
    gb = jnp.concatenate(
        [
            jnp.concatenate([params["gh"], params["gc"]], axis=1),      # gamma (1, 2L)
            jnp.concatenate([params["betah"], params["betac"]], axis=1) # beta  (1, 2L)
        ],
        axis=0,
    )                                                                    # (2, 2L)

    vmem_spec = pl.BlockSpec(memory_space=pltpu.VMEM)

    out = pl.pallas_call(
        _latent_states_kernel,
        out_shape=jax.ShapeDtypeStruct((1, B, 2 * lstm_dim), jnp.float32),
        in_specs=[vmem_spec, vmem_spec, vmem_spec],
        out_specs=vmem_spec,
    )(x, w, gb)

    dec_h = out[:, :, :lstm_dim]
    dec_c = out[:, :, lstm_dim:]
    return dec_h, dec_c


def init_params(key, codelayer_dim, lstm_dim):
    ks = jax.random.split(key, 4)
    bound = 1.0 / jnp.sqrt(codelayer_dim)
    params = {
        # Linear weights stored transposed: (in, out)
        "wh": jax.random.uniform(ks[0], (codelayer_dim, lstm_dim),
                                 jnp.float32, -bound, bound),
        "bh": jax.random.uniform(ks[1], (1, lstm_dim), jnp.float32, -bound, bound),
        "wc": jax.random.uniform(ks[2], (codelayer_dim, lstm_dim),
                                 jnp.float32, -bound, bound),
        "bc": jax.random.uniform(ks[3], (1, lstm_dim), jnp.float32, -bound, bound),
        # BatchNorm1d affine params (PyTorch init: gamma=1, beta=0)
        "gh": jnp.ones((1, lstm_dim), jnp.float32),
        "betah": jnp.zeros((1, lstm_dim), jnp.float32),
        "gc": jnp.ones((1, lstm_dim), jnp.float32),
        "betac": jnp.zeros((1, lstm_dim), jnp.float32),
    }
    return params


def _reference(x, params):
    """Faithful PyTorch-semantics reference: Linear(+bias) -> BN(train) -> ReLU."""
    def branch(w, b, g, beta):
        y = x @ w + b
        mean = y.mean(axis=0, keepdims=True)
        var = ((y - mean) ** 2).mean(axis=0, keepdims=True)
        y = (y - mean) / jnp.sqrt(var + BN_EPS) * g + beta
        return jnp.maximum(y, 0.0)
    h = branch(params["wh"], params["bh"], params["gh"], params["betah"])
    c = branch(params["wc"], params["bc"], params["gc"], params["betac"])
    return h[None], c[None]


if __name__ == "__main__":
    B = 8               # batch
    codelayer_dim = 16  # latent code size
    lstm_dim = 32       # LSTM hidden size

    key = jax.random.PRNGKey(0)
    k_x, k_p = jax.random.split(key)
    x = jax.random.normal(k_x, (B, codelayer_dim), jnp.float32)
    params = init_params(k_p, codelayer_dim, lstm_dim)

    dec_h, dec_c = latent_states_forward(x, params)
    dec_h, dec_c = jax.block_until_ready((dec_h, dec_c))

    ref_h, ref_c = _reference(x, params)
    assert dec_h.shape == (1, B, lstm_dim) and dec_c.shape == (1, B, lstm_dim)
    assert jnp.allclose(dec_h, ref_h, atol=1e-5, rtol=1e-5)
    assert jnp.allclose(dec_c, ref_c, atol=1e-5, rtol=1e-5)

    print("KERNEL_OK")
</pallas_src>

<mosaic_0001>
module attributes {stable_mosaic.version = 11 : i64} {
  func.func @_latent_states_kernel(%arg0: memref<8x16xf32, #tpu.memory_space<vmem>>, %arg1: memref<16x64xf32, #tpu.memory_space<vmem>>, %arg2: memref<2x64xf32, #tpu.memory_space<vmem>>, %arg3: memref<1x8x64xf32, #tpu.memory_space<vmem>>) attributes {dimension_semantics = [], scalar_prefetch = 0 : i64, scratch_operands = 0 : i64, tpu.core_type = #tpu.core_type<tc>} {
    %c0 = arith.constant 0 : index
    %c0_0 = arith.constant 0 : index
    %0 = vector.load %arg0[%c0, %c0_0] : memref<8x16xf32, #tpu.memory_space<vmem>>, vector<8x16xf32>
    %c0_1 = arith.constant 0 : index
    %c0_2 = arith.constant 0 : index
    %1 = vector.load %arg1[%c0_1, %c0_2] : memref<16x64xf32, #tpu.memory_space<vmem>>, vector<16x64xf32>
    %cst = arith.constant dense<0.000000e+00> : vector<8x64xf32>
    %2 = tpu.matmul %0, %1, %cst {dimension_numbers = #tpu.dot_dimension_numbers<[1], [0], [0], [1], [0, 0, 1, 1], [], []>} : vector<8x16xf32>, vector<16x64xf32>, vector<8x64xf32> -> vector<8x64xf32>
    %cst_3 = arith.constant dense<0.000000e+00> : vector<64xf32>
    %3 = vector.multi_reduction <add>, %2, %cst_3 [0] : vector<8x64xf32> to vector<64xf32>
    %4 = vector.shape_cast %3 : vector<64xf32> to vector<1x64xf32>
    %5 = arith.mulf %2, %2 : vector<8x64xf32>
    %cst_4 = arith.constant dense<0.000000e+00> : vector<64xf32>
    %6 = vector.multi_reduction <add>, %5, %cst_4 [0] : vector<8x64xf32> to vector<64xf32>
    %7 = vector.shape_cast %6 : vector<64xf32> to vector<1x64xf32>
    %cst_5 = arith.constant 1.250000e-01 : f32
    %8 = vector.broadcast %cst_5 : f32 to vector<1x64xf32>
    %9 = arith.mulf %4, %8 : vector<1x64xf32>
    %cst_6 = arith.constant 1.250000e-01 : f32
    %10 = vector.broadcast %cst_6 : f32 to vector<1x64xf32>
    %11 = arith.mulf %7, %10 : vector<1x64xf32>
    %12 = arith.mulf %9, %9 : vector<1x64xf32>
    %13 = arith.subf %11, %12 : vector<1x64xf32>
    %cst_7 = arith.constant 0.000000e+00 : f32
    %14 = vector.broadcast %cst_7 : f32 to vector<1x64xf32>
    %15 = arith.maximumf %13, %14 : vector<1x64xf32>
    %c0_8 = arith.constant 0 : index
    %c0_9 = arith.constant 0 : index
    %16 = vector.load %arg2[%c0_8, %c0_9] : memref<2x64xf32, #tpu.memory_space<vmem>>, vector<1x64xf32>
    %c1 = arith.constant 1 : index
    %c0_10 = arith.constant 0 : index
    %17 = vector.load %arg2[%c1, %c0_10] : memref<2x64xf32, #tpu.memory_space<vmem>>, vector<1x64xf32>
    %cst_11 = arith.constant 9.99999974E-6 : f32
    %18 = vector.broadcast %cst_11 : f32 to vector<1x64xf32>
    %19 = arith.addf %15, %18 : vector<1x64xf32>
    %20 = math.rsqrt %19 : vector<1x64xf32>
    %21 = arith.mulf %16, %20 : vector<1x64xf32>
    %22 = arith.mulf %9, %21 : vector<1x64xf32>
    %23 = arith.subf %17, %22 : vector<1x64xf32>
    %24 = vector.broadcast %21 : vector<1x64xf32> to vector<8x64xf32>
    %25 = arith.mulf %2, %24 : vector<8x64xf32>
    %26 = vector.broadcast %23 : vector<1x64xf32> to vector<8x64xf32>
    %27 = arith.addf %25, %26 : vector<8x64xf32>
    %cst_12 = arith.constant 0.000000e+00 : f32
    %28 = vector.broadcast %cst_12 : f32 to vector<8x64xf32>
    %29 = arith.maximumf %27, %28 : vector<8x64xf32>
    %c0_13 = arith.constant 0 : index
    %c0_14 = arith.constant 0 : index
    %c0_15 = arith.constant 0 : index
    %30 = vector.load %arg3[%c0_13, %c0_14, %c0_15] : memref<1x8x64xf32, #tpu.memory_space<vmem>>, vector<1x8x64xf32>
    %31 = vector.shape_cast %30 : vector<1x8x64xf32> to vector<8x64xf32>
    %32 = vector.shape_cast %29 : vector<8x64xf32> to vector<1x8x64xf32>
    tpu.vector_store %arg3[%c0_13, %c0_14, %c0_15], %32 {strides = array<i32>} : memref<1x8x64xf32, #tpu.memory_space<vmem>>, vector<1x8x64xf32>,
    return
  }
}

</mosaic_0001>

<llo_original>
// kernel: tpu_custom_call.1
$region0: #{tpu_custom_call.1}
  #allocation0 [shape = 'u32[]', space=smem, size = 0x4, offset = 0x4, fixed_abs, tag = 'smem constant byte address 0x4 - core index']
  #allocation1 [shape = 'u32[72,128]{1,0:T(1,128)}', space=vmem, size = 0x9000, scoped, tag = 'internal scratch']
  %s0 = inlined_call_operand.hbm [shape: f32[8,16], index: 0, kind: input, shape index: {}]
  %s1 = inlined_call_operand.hbm [shape: f32[16,64], index: 1, kind: input, shape index: {}]
  %s2 = inlined_call_operand.hbm [shape: f32[2,64], index: 2, kind: input, shape index: {}]
  %s3 = inlined_call_operand.hbm [shape: f32[1,8,64], index: 3, kind: output, shape index: {}]
  %s4 = sld [smem:[#allocation0]]
  $region34: #{tpu_custom_call.1} parent=0
    _
  %s6 = ssub.s32 1, %s4
  %s7 = scalar_select 0, %s6, %s4
  $region1: #{tpu_custom_call.1} parent=0
    #allocation2 [shape = 'u8[4096]{0}', space=vmem, size = 0x1000, scoped, tag = 'input window, operand 0, single buffered']
    #allocation3 [shape = 's32[1]{0}', space=sflag, size = 0x4, scoped, tag = 'scoped memory for tpu_custom_call.1']
    #allocation4 [shape = 's32[1]{0}', space=sflag, size = 0x4, scoped, tag = 'scoped memory for tpu_custom_call.1']
    #allocation5 [shape = 'u8[8192]{0}', space=vmem, size = 0x2000, scoped, tag = 'input window, operand 1, single buffered']
    #allocation6 [shape = 's32[1]{0}', space=sflag, size = 0x4, scoped, tag = 'scoped memory for tpu_custom_call.1']
    #allocation7 [shape = 'u8[1024]{0}', space=vmem, size = 0x400, scoped, tag = 'input window, operand 2, single buffered']
    #allocation8 [shape = 'u8[4096]{0}', space=vmem, size = 0x1000, scoped, tag = 'output window, operand 0, single buffered']
    %8 = vsyncpa [#allocation3], 0
    %9 = vsyncpa [#allocation6], 0
    %10 = vsyncpa [#allocation4], 0
    // Predicated region
    $region2: #{tpu_custom_call.1} parent=1 // pred_check
      _
    $region3: #{tpu_custom_call.1} parent=1 // pred_check_branch
      %12 = sbr.rel (0) target = $region5
    $region4: #{tpu_custom_call.1} parent=1 // pred_region
      %14 = vsyncadd [#allocation3], 0
      %s16 = sshll.u32 %s0, 4
      %s17 = int_to_ptr.hbm [resolvable:$true] %s16
      %s18 = sshll.u32 [#allocation2], 4
      %s19 = int_to_ptr.vmem [resolvable:$true] %s18
      %21 = dma.hbm_to_vmem [thread:$0]  %s17, 128, %s19, [#allocation3]
    $region5: #{tpu_custom_call.1} parent=1 // pred_fallthru
      _
    // Predicated region
    $region6: #{tpu_custom_call.1} parent=1 // pred_check
      _
    $region7: #{tpu_custom_call.1} parent=1 // pred_check_branch
      %23 = sbr.rel (0) target = $region9
    $region8: #{tpu_custom_call.1} parent=1 // pred_region
      %25 = vsyncadd [#allocation6], 0
      %s26 = sshll.u32 %s1, 4
      %s27 = int_to_ptr.hbm [resolvable:$true] %s26
      %s28 = sshll.u32 [#allocation5], 4
      %s29 = int_to_ptr.vmem [resolvable:$true] %s28
      %34 = dma.hbm_to_vmem [thread:$0]  %s27, 256, %s29, [#allocation6], 128, 128, 8
    $region9: #{tpu_custom_call.1} parent=1 // pred_fallthru
      _
    // Predicated region
    $region10: #{tpu_custom_call.1} parent=1 // pred_check
      _
    $region11: #{tpu_custom_call.1} parent=1 // pred_check_branch
      %36 = sbr.rel (0) target = $region13
    $region12: #{tpu_custom_call.1} parent=1 // pred_region
      %38 = vsyncadd [#allocation6], 0
      %s40 = sshll.u32 %s2, 4
      %s41 = int_to_ptr.hbm [resolvable:$true] %s40
      %s42 = sshll.u32 [#allocation7], 4
      %s43 = int_to_ptr.vmem [resolvable:$true] %s42
      %45 = dma.hbm_to_vmem [thread:$0]  %s41, 32, %s43, [#allocation6]
    $region13: #{tpu_custom_call.1} parent=1 // pred_fallthru
      _
    // Predicated region
    $region14: #{tpu_custom_call.1} parent=1 // pred_check
      _
    $region15: #{tpu_custom_call.1} parent=1 // pred_check_branch
      %47 = sbr.rel (0) target = $region17
    $region16: #{tpu_custom_call.1} parent=1 // pred_region
      %49 = dma.done [#allocation3], 128
    $region17: #{tpu_custom_call.1} parent=1 // pred_fallthru
      _
    // Predicated region
    $region18: #{tpu_custom_call.1} parent=1 // pred_check
      _
    $region19: #{tpu_custom_call.1} parent=1 // pred_check_branch
      %51 = sbr.rel (0) target = $region21
    $region20: #{tpu_custom_call.1} parent=1 // pred_region
      %53 = dma.done [#allocation6], 256
    $region21: #{tpu_custom_call.1} parent=1 // pred_fallthru
      _
    // Predicated region
    $region22: #{tpu_custom_call.1} parent=1 // pred_check
      _
    $region23: #{tpu_custom_call.1} parent=1 // pred_check_branch
      %55 = sbr.rel (0) target = $region25
    $region24: #{tpu_custom_call.1} parent=1 // pred_region
      %57 = dma.done [#allocation6], 32
    $region25: #{tpu_custom_call.1} parent=1 // pred_fallthru
      _
    %v58 = vld [vmem:[#allocation2] sm:$0xff]
    %v59 = vld [vmem:[#allocation5] sm:$0xff]
    %v60 = vld [vmem:[#allocation5 + $0x8] sm:$0xff]
    %vm61 = vcmask 130048
    %v63 = vsel %vm61, %v58, 0
    %65 = vmatpush.msra.mxu0 0.0
    %66 = vmatpush.msra.mxu0 0.0
    %67 = vmatpush.msra.mxu0 0.0
    %68 = vmatpush.msra.mxu0 0.0
    %69 = vmatpush.msra.mxu0 0.0
    %70 = vmatpush.msra.mxu0 0.0
    %71 = vmatpush.msra.mxu0 0.0
    %72 = vmatpush.msra.mxu0 0.0
    %73 = vmatpush.msra.mxu0 0.0
    %74 = vmatpush.msra.mxu0 0.0
    %75 = vmatpush.msra.mxu0 0.0
    %76 = vmatpush.msra.mxu0 0.0
    %77 = vmatpush.msra.mxu0 0.0
    %78 = vmatpush.msra.mxu0 0.0
    %79 = vmatpush.msra.mxu0 %v60
    %80 = vmatpush.msra.mxu0 %v59
    %81 = vmatmul.f32.gmra.mxu0 %v63
    %v82 = vpop.f32.mrf.mxu0
    %v83 = vadd.f32 0.0, %v82
    %84 = vdwg.mxu0
    %vm85 = vcmask 523264
    %v86 = vsel %vm85, %v83, 0.0
    %v87 = vrot.slane %v86, 4
    %v88 = vadd.f32 %v86, %v87
    %v89 = vrot.slane %v88, 2
    %v90 = vadd.f32 %v88, %v89
    %v91 = vrot.slane %v90, 1
    %v92 = vadd.f32 %v90, %v91
    %v93 = vmul.f32 %v83, %v83
    %v94 = vsel %vm85, %v93, 0.0
    %v95 = vrot.slane %v94, 4
    %v96 = vadd.f32 %v94, %v95
    %v97 = vrot.slane %v96, 2
    %v98 = vadd.f32 %v96, %v97
    %v99 = vrot.slane %v98, 1
    %v100 = vadd.f32 %v98, %v99
    %v101 = vmul.f32 %v92, 0.125
    %v102 = vmul.f32 %v100, 0.125
    %v103 = vmul.f32 %v101, %v101
    %v104 = vsub.f32 %v102, %v103
    %v105 = vmax.f32 %v104, 0.0
    %v106 = vld [vmem:[#allocation7] sm:$0x1]
    %v107 = vld [vmem:[#allocation7 + $0x1] sm:$0x1]
    %v108 = vadd.f32 %v105, 1e-05
    %v109 = vrsqrt.pop %v108
    %v110 = vmul.f32 %v109, %v108
    %v111 = vmul.f32 %v110, %v109
    %v112 = vmul.f32 0.5, %v111
    %v113 = vsub.f32 1.5, %v112
    %v114 = vmul.f32 %v109, %v113
    %vm115 = vweird.f32 %v108
    %vm116 = vweird.f32 %v109
    %vm117 = vmor %vm115, %vm116
    %v118 = vsel %vm117, %v109, %v114
    %v119 = vmul.f32 %v106, %v118
    %v120 = vmul.f32 %v101, %v119
    %v121 = vsub.f32 %v107, %v120
    %v122 = vperm.slane %v119, 0
    %v123 = vmul.f32 %v83, %v122
    %v124 = vperm.slane %v121, 0
    %v125 = vadd.f32 %v123, %v124
    %v126 = vmax.f32 %v125, 0.0
    %127 = vst.msk [vmem:[#allocation8] sm:$0xff] %vm85, %v126
    // Predicated region
    $region26: #{tpu_custom_call.1} parent=1 // pred_check
      _
    $region27: #{tpu_custom_call.1} parent=1 // pred_check_branch
      %129 = sbr.rel (0) target = $region29
    $region28: #{tpu_custom_call.1} parent=1 // pred_region
      %131 = vsyncadd [#allocation4], 0
      %s133 = sshll.u32 [#allocation8], 4
      %s134 = int_to_ptr.vmem [resolvable:$true] %s133
      %s135 = sshll.u32 %s3, 4
      %s136 = int_to_ptr.hbm [resolvable:$true] %s135
      %138 = dma.vmem_to_hbm [thread:$0]  %s134, 128, %s136, [#allocation4]
    $region29: #{tpu_custom_call.1} parent=1 // pred_fallthru
      _
    // Predicated region
    $region30: #{tpu_custom_call.1} parent=1 // pred_check
      _
    $region31: #{tpu_custom_call.1} parent=1 // pred_check_branch
      %140 = sbr.rel (0) target = $region33
    $region32: #{tpu_custom_call.1} parent=1 // pred_region
      %142 = dma.done [#allocation4], 128
    $region33: #{tpu_custom_call.1} parent=1 // pred_fallthru
      _
    %143 = vsyncpa [#allocation3], 1
    %144 = vsyncpa [#allocation6], 1
    %145 = vsyncpa [#allocation4], 1

</llo_original>
